<compile_context>
chip_gen: v7x
topology: tpu7x:2x2x1
jax: 0.10.0
libtpu: 0.0.40
codegen_flags: <defaults>
</compile_context>

<pallas_src>
import functools
import math

import jax
import jax.numpy as jnp
from jax.experimental import pallas as pl
from jax.experimental.pallas import tpu as pltpu


def _device_vmem_bytes():
    try:
        return int(pltpu.get_tpu_info().vmem_capacity_bytes)
    except Exception:
        return 128 * 1024 * 1024


def _pick_tm(b, d, itemsize, budget):
    """Largest row-block TM that divides B and whose live VMEM fits `budget`."""
    resident = 2 * b * d * itemsize          # single-copy (D,B) operands
    fallback = None
    for tm in (256, 128, 64, 32, 16, 8):
        if b % tm:
            continue
        if fallback is None:
            fallback = tm
        live = resident + 4 * tm * d * itemsize + 6 * tm * b * 4
        if live <= budget:
            return tm
    return fallback if fallback is not None else b


def _sdm_kernel(v_blk_ref, t_blk_ref, v_t_hbm, t_t_hbm,
                lab_blk_ref, lab_row_ref, log_inv_ref,
                o_ref,
                v_t_vmem, t_t_vmem, acc_ref, dma_sem,
                *, log_eps, inv_b):
    i = pl.program_id(0)

    # ---- step 0: one DMA of the (already normalized / scaled) transposed
    #      operands into single-copy VMEM scratch; accumulator init.
    @pl.when(i == 0)
    def _init():
        cv = pltpu.make_async_copy(v_t_hbm, v_t_vmem, dma_sem.at[0])
        ct = pltpu.make_async_copy(t_t_hbm, t_t_vmem, dma_sem.at[1])
        cv.start()
        ct.start()
        cv.wait()
        ct.wait()
        acc_ref[...] = jnp.zeros_like(acc_ref)

    # ---- log target distribution for this row block (no (TM,B) log):
    #      log_ld[r, j] = log(1/count_j + eps) if labels match else log(eps).
    match = lab_blk_ref[...] == lab_row_ref[...]                   # (TM, B)
    log_ld = jnp.where(match, log_inv_ref[...], log_eps)           # (TM, B)

    def kl_rows(scores):
        # sum_j softmax*(log_softmax - log_ld)
        #   = sum_j e*(s - m - log_ld) / ssum  -  log(ssum)
        m = jnp.max(scores, axis=1, keepdims=True)
        sh = scores - m
        e = jnp.exp(sh)
        ssum = jnp.sum(e, axis=1, keepdims=True)
        num = jnp.sum(e * (sh - log_ld), axis=1, keepdims=True)
        return num / ssum - jnp.log(ssum)                           # (TM, 1)

    # i2t: vision rows x all (scaled) text — canonical (TM,D)@(D,B) matmul.
    s_i2t = jnp.dot(v_blk_ref[...], t_t_vmem[...],
                    preferred_element_type=jnp.float32)             # (TM, B)
    acc_ref[...] += jnp.sum(kl_rows(s_i2t), axis=0, keepdims=True)

    # t2i: (scaled) text rows x all vision — second tile after the first
    # tile's reduction (halves peak (TM,B) f32 footprint).
    s_t2i = jnp.dot(t_blk_ref[...], v_t_vmem[...],
                    preferred_element_type=jnp.float32)             # (TM, B)
    acc_ref[...] += jnp.sum(kl_rows(s_t2i), axis=0, keepdims=True)

    # ---- finalize: mean over rows of both terms == accumulated sum / B.
    @pl.when(i == pl.num_programs(0) - 1)
    def _fin():
        o_ref[...] = acc_ref[...] * inv_b


def sdm_loss(vision_features, text_features, labels, length,
             epsilon=1e-8, compute_dtype=jnp.bfloat16):
    """Pallas TPU equivalent of Similarity_Distribution_Matching_Loss.forward."""
    B, D = vision_features.shape
    assert text_features.shape == (B, D)
    logit_scale = float(length)

    # ---- wrapper-side precompute (exact f32, one-time) ---------------------
    labels_col = jnp.asarray(labels, dtype=jnp.float32).reshape(B, 1)
    lab_row = labels_col.reshape(1, B)
    # Per-column match count (label matrix is symmetric, so this reproduces
    # PyTorch's `labels / labels.sum(dim=1)` broadcast exactly).
    counts = jnp.sum((labels_col == lab_row).astype(jnp.float32),
                     axis=0, keepdims=True)                          # (1, B)
    log_inv = jnp.log(1.0 / counts + epsilon)                        # (1, B)
    log_eps = float(math.log(epsilon))

    v32 = vision_features.astype(jnp.float32)
    t32 = text_features.astype(jnp.float32)
    v_n = v32 / jnp.linalg.norm(v32, axis=1, keepdims=True)
    t_n = t32 / jnp.linalg.norm(t32, axis=1, keepdims=True)
    t_s = logit_scale * t_n            # scale folded into text only

    compute_dtype = jnp.dtype(compute_dtype)
    v_rows = v_n.astype(compute_dtype)           # (B, D) unscaled vision
    t_rows = t_s.astype(compute_dtype)           # (B, D) scaled text
    v_t = v_rows.T                               # (D, B) rhs for t2i
    t_t = t_rows.T                               # (D, B) rhs for i2t

    # ---- tiling / VMEM budget ----------------------------------------------
    itemsize = compute_dtype.itemsize
    dev_vmem = _device_vmem_bytes()
    tm = _pick_tm(B, D, itemsize, budget=int(0.55 * dev_vmem))
    assert B % tm == 0, (B, tm)
    num_blocks = B // tm

    est = (2 * B * D * itemsize            # resident single-copy (D,B) operands
           + 4 * tm * D * itemsize         # double-buffered (TM,D) row blocks
           + 2 * tm * 128 * 4              # label column blocks (lane padded)
           + 4 * 8 * max(B, 128) * 4       # (1,B) rows (sublane padded, dbuf)
           + 6 * tm * B * 4                # score tile + softmax temporaries
           + (1 << 20))
    vmem_limit = int(min(0.85 * dev_vmem, max(1.25 * est, 32 * 1024 * 1024)))

    kernel = functools.partial(_sdm_kernel, log_eps=log_eps, inv_b=1.0 / B)

    out = pl.pallas_call(
        kernel,
        out_shape=jax.ShapeDtypeStruct((1, 1), jnp.float32),
        grid_spec=pltpu.PrefetchScalarGridSpec(
            num_scalar_prefetch=0,
            grid=(num_blocks,),
            in_specs=[
                pl.BlockSpec((tm, D), lambda i: (i, 0)),   # vision row block
                pl.BlockSpec((tm, D), lambda i: (i, 0)),   # scaled text row block
                pl.BlockSpec(memory_space=pl.ANY),         # vision^T (stays in HBM)
                pl.BlockSpec(memory_space=pl.ANY),         # scaled text^T (HBM)
                pl.BlockSpec((tm, 1), lambda i: (i, 0)),   # label column block
                pl.BlockSpec((1, B), lambda i: (0, 0)),    # label row (lane-major)
                pl.BlockSpec((1, B), lambda i: (0, 0)),    # log(1/count + eps) row
            ],
            out_specs=pl.BlockSpec((1, 1), lambda i: (0, 0)),
            scratch_shapes=[
                pltpu.VMEM((D, B), compute_dtype),         # vision^T, single copy
                pltpu.VMEM((D, B), compute_dtype),         # scale*text^T, single copy
                pltpu.VMEM((1, 1), jnp.float32),           # loss accumulator
                pltpu.SemaphoreType.DMA((2,)),             # one-time operand DMAs
            ],
        ),
        compiler_params=pltpu.CompilerParams(
            # Grid axis feeds a shared accumulator + the step-0 resident load,
            # so it must stay serial ("arbitrary").
            dimension_semantics=("arbitrary",),
            vmem_limit_bytes=vmem_limit,
        ),
    )(v_rows, t_rows, v_t, t_t, labels_col, lab_row, log_inv)
    return out[0, 0]


def sdm_loss_reference(vision, text, labels, length, epsilon=1e-8):
    """Pure-JAX mirror of the PyTorch forward, for validation."""
    labels = jnp.asarray(labels, dtype=jnp.float32).reshape(-1, 1)
    lab = ((labels - labels.T) == 0).astype(jnp.float32)
    v_n = vision / jnp.linalg.norm(vision, axis=1, keepdims=True)
    t_n = text / jnp.linalg.norm(text, axis=1, keepdims=True)
    t2i = t_n @ v_n.T
    i2t = t2i.T
    text_proj_image = length * t2i
    vision_proj_text = length * i2t
    ld = lab / jnp.sum(lab, axis=1)            # same trailing-dim broadcast as torch
    i2t_pred = jax.nn.softmax(vision_proj_text, axis=1)
    i2t_loss = i2t_pred * (jax.nn.log_softmax(vision_proj_text, axis=1)
                           - jnp.log(ld + epsilon))
    t2i_pred = jax.nn.softmax(text_proj_image, axis=1)
    t2i_loss = t2i_pred * (jax.nn.log_softmax(text_proj_image, axis=1)
                           - jnp.log(ld + epsilon))
    return jnp.mean(jnp.sum(i2t_loss, axis=1)) + jnp.mean(jnp.sum(t2i_loss, axis=1))


if __name__ == "__main__":
    # Small deterministic inputs consistent with the module's forward:
    # B=8 samples, D=32 feature dim, integer person-IDs (with duplicates).
    B, D = 8, 32
    length = 16.0  # module's `length` constructor arg (logit scale)

    key = jax.random.PRNGKey(0)
    kv, kt = jax.random.split(key)
    vision = jax.random.normal(kv, (B, D), dtype=jnp.float32)
    text = jax.random.normal(kt, (B, D), dtype=jnp.float32)
    labels = jnp.array([[0.0], [1.0], [0.0], [2.0], [1.0], [3.0], [2.0], [3.0]],
                       dtype=jnp.float32)

    ref = sdm_loss_reference(vision, text, labels, length)

    # Default bf16-compute path (f32 normalization + f32 MXU accumulation).
    loss_bf16 = sdm_loss(vision, text, labels, length)
    jax.block_until_ready(loss_bf16)

    # Higher-fidelity f32-compute path.
    loss_f32 = sdm_loss(vision, text, labels, length, compute_dtype=jnp.float32)
    jax.block_until_ready(loss_f32)

    if not jnp.allclose(loss_f32, ref, rtol=1e-2, atol=1e-3):
        raise AssertionError(
            f"SDM loss mismatch (f32): kernel={float(loss_f32):.6f} ref={float(ref):.6f}")
    if not jnp.allclose(loss_bf16, ref, rtol=5e-2, atol=1e-2):
        raise AssertionError(
            f"SDM loss mismatch (bf16): kernel={float(loss_bf16):.6f} ref={float(ref):.6f}")
    print("KERNEL_OK")
</pallas_src>

<mosaic_0001>
module attributes {stable_mosaic.version = 11 : i64} {
  func.func @_sdm_kernel(%arg0: i32, %arg1: memref<8x32xbf16, #tpu.memory_space<vmem>>, %arg2: memref<8x32xbf16, #tpu.memory_space<vmem>>, %arg3: memref<32x8xbf16, #tpu.memory_space<any>>, %arg4: memref<32x8xbf16, #tpu.memory_space<any>>, %arg5: memref<8x1xf32, #tpu.memory_space<vmem>>, %arg6: memref<1x8xf32, #tpu.memory_space<vmem>>, %arg7: memref<1x8xf32, #tpu.memory_space<vmem>>, %arg8: memref<1x1xf32, #tpu.memory_space<vmem>>, %arg9: memref<32x8xbf16, #tpu.memory_space<vmem>>, %arg10: memref<32x8xbf16, #tpu.memory_space<vmem>>, %arg11: memref<1x1xf32, #tpu.memory_space<vmem>>, %arg12: memref<2x!tpu.dma_semaphore, #tpu.memory_space<semaphore_mem>>) attributes {dimension_semantics = [#tpu.dimension_semantics<arbitrary>], iteration_bounds = array<i64: 1>, scalar_prefetch = 0 : i64, scratch_operands = 4 : i64, tpu.core_type = #tpu.core_type<tc>, window_params = [{transform_indices = @transform_0, window_bounds = array<i64: 8, 32>}, {transform_indices = @transform_1, window_bounds = array<i64: 8, 32>}, {}, {}, {transform_indices = @transform_4, window_bounds = array<i64: 8, 1>}, {pipeline_mode = #tpu.pipeline_mode<synchronous>, transform_indices = @transform_5, window_bounds = array<i64: 1, 8>}, {pipeline_mode = #tpu.pipeline_mode<synchronous>, transform_indices = @transform_6, window_bounds = array<i64: 1, 8>}, {pipeline_mode = #tpu.pipeline_mode<synchronous>, transform_indices = @transform_7, window_bounds = array<i64: 1, 1>}]} {
    %c0_i32 = arith.constant 0 : i32
    %0 = arith.cmpi eq, %arg0, %c0_i32 : i32
    %1 = arith.extui %0 : i1 to i32
    %c0_i32_0 = arith.constant 0 : i32
    %2 = arith.cmpi ne, %1, %c0_i32_0 : i32
    scf.if %2 {
      %c0_i32_34 = arith.constant 0 : i32
      %60 = tpu.memref_slice %arg12[%c0_i32_34] : memref<2x!tpu.dma_semaphore, #tpu.memory_space<semaphore_mem>> -> memref<1x!tpu.dma_semaphore, #tpu.memory_space<semaphore_mem>>
      %61 = tpu.memref_squeeze %60 : memref<1x!tpu.dma_semaphore, #tpu.memory_space<semaphore_mem>> -> memref<!tpu.dma_semaphore, #tpu.memory_space<semaphore_mem>>
      tpu.enqueue_dma source(%arg3 : memref<32x8xbf16, #tpu.memory_space<any>>) target(%arg9 : memref<32x8xbf16, #tpu.memory_space<vmem>>) target_semaphore(%61 : memref<!tpu.dma_semaphore, #tpu.memory_space<semaphore_mem>>)
      %c1_i32 = arith.constant 1 : i32
      %62 = tpu.memref_slice %arg12[%c1_i32] : memref<2x!tpu.dma_semaphore, #tpu.memory_space<semaphore_mem>> -> memref<1x!tpu.dma_semaphore, #tpu.memory_space<semaphore_mem>>
      %63 = tpu.memref_squeeze %62 : memref<1x!tpu.dma_semaphore, #tpu.memory_space<semaphore_mem>> -> memref<!tpu.dma_semaphore, #tpu.memory_space<semaphore_mem>>
      tpu.enqueue_dma source(%arg4 : memref<32x8xbf16, #tpu.memory_space<any>>) target(%arg10 : memref<32x8xbf16, #tpu.memory_space<vmem>>) target_semaphore(%63 : memref<!tpu.dma_semaphore, #tpu.memory_space<semaphore_mem>>)
      %c0_i32_35 = arith.constant 0 : i32
      %64 = tpu.memref_slice %arg12[%c0_i32_35] : memref<2x!tpu.dma_semaphore, #tpu.memory_space<semaphore_mem>> -> memref<1x!tpu.dma_semaphore, #tpu.memory_space<semaphore_mem>>
      %65 = tpu.memref_squeeze %64 : memref<1x!tpu.dma_semaphore, #tpu.memory_space<semaphore_mem>> -> memref<!tpu.dma_semaphore, #tpu.memory_space<semaphore_mem>>
      tpu.wait_dma2 semaphore(%65 : memref<!tpu.dma_semaphore, #tpu.memory_space<semaphore_mem>>) src(%arg3 : memref<32x8xbf16, #tpu.memory_space<any>>) dst(%arg9 : memref<32x8xbf16, #tpu.memory_space<vmem>>)
      %c1_i32_36 = arith.constant 1 : i32
      %66 = tpu.memref_slice %arg12[%c1_i32_36] : memref<2x!tpu.dma_semaphore, #tpu.memory_space<semaphore_mem>> -> memref<1x!tpu.dma_semaphore, #tpu.memory_space<semaphore_mem>>
      %67 = tpu.memref_squeeze %66 : memref<1x!tpu.dma_semaphore, #tpu.memory_space<semaphore_mem>> -> memref<!tpu.dma_semaphore, #tpu.memory_space<semaphore_mem>>
      tpu.wait_dma2 semaphore(%67 : memref<!tpu.dma_semaphore, #tpu.memory_space<semaphore_mem>>) src(%arg4 : memref<32x8xbf16, #tpu.memory_space<any>>) dst(%arg10 : memref<32x8xbf16, #tpu.memory_space<vmem>>)
      %cst_37 = arith.constant 0.000000e+00 : f32
      %68 = vector.broadcast %cst_37 : f32 to vector<1x1xf32>
      %c0_38 = arith.constant 0 : index
      %c0_39 = arith.constant 0 : index
      %69 = vector.load %arg11[%c0_38, %c0_39] : memref<1x1xf32, #tpu.memory_space<vmem>>, vector<1x1xf32>
      tpu.vector_store %arg11[%c0_38, %c0_39], %68 {strides = array<i32>} : memref<1x1xf32, #tpu.memory_space<vmem>>, vector<1x1xf32>,
    } else {
    }
    %c0 = arith.constant 0 : index
    %c0_1 = arith.constant 0 : index
    %3 = vector.load %arg5[%c0, %c0_1] : memref<8x1xf32, #tpu.memory_space<vmem>>, vector<8x1xf32>
    %c0_2 = arith.constant 0 : index
    %c0_3 = arith.constant 0 : index
    %4 = vector.load %arg6[%c0_2, %c0_3] : memref<1x8xf32, #tpu.memory_space<vmem>>, vector<1x8xf32>
    %5 = vector.broadcast %3 : vector<8x1xf32> to vector<8x8xf32>
    %6 = vector.broadcast %4 : vector<1x8xf32> to vector<8x8xf32>
    %7 = arith.cmpf oeq, %5, %6 : vector<8x8xf32>
    %c0_4 = arith.constant 0 : index
    %c0_5 = arith.constant 0 : index
    %8 = vector.load %arg7[%c0_4, %c0_5] : memref<1x8xf32, #tpu.memory_space<vmem>>, vector<1x8xf32>
    %cst = arith.constant -18.420681 : f32
    %9 = vector.shape_cast %8 : vector<1x8xf32> to vector<1x8xf32>
    %10 = vector.broadcast %9 : vector<1x8xf32> to vector<8x8xf32>
    %11 = vector.broadcast %cst : f32 to vector<8x8xf32>
    %12 = arith.select %7, %10, %11 : vector<8x8xi1>, vector<8x8xf32>
    %c0_6 = arith.constant 0 : index
    %c0_7 = arith.constant 0 : index
    %13 = vector.load %arg1[%c0_6, %c0_7] : memref<8x32xbf16, #tpu.memory_space<vmem>>, vector<8x32xbf16>
    %c0_8 = arith.constant 0 : index
    %c0_9 = arith.constant 0 : index
    %14 = vector.load %arg10[%c0_8, %c0_9] : memref<32x8xbf16, #tpu.memory_space<vmem>>, vector<32x8xbf16>
    %cst_10 = arith.constant dense<0.000000e+00> : vector<8x8xf32>
    %15 = tpu.matmul %13, %14, %cst_10 {dimension_numbers = #tpu.dot_dimension_numbers<[1], [0], [0], [1], [0, 0, 1, 1], [], []>} : vector<8x32xbf16>, vector<32x8xbf16>, vector<8x8xf32> -> vector<8x8xf32>
    %c0_11 = arith.constant 0 : index
    %c0_12 = arith.constant 0 : index
    %16 = vector.load %arg11[%c0_11, %c0_12] : memref<1x1xf32, #tpu.memory_space<vmem>>, vector<1x1xf32>
    %cst_13 = arith.constant dense<0xFF800000> : vector<8xf32>
    %17 = vector.multi_reduction <maximumf>, %15, %cst_13 [1] : vector<8x8xf32> to vector<8xf32>
    %18 = vector.shape_cast %17 : vector<8xf32> to vector<8x1xf32>
    %19 = vector.broadcast %18 : vector<8x1xf32> to vector<8x8xf32>
    %20 = arith.subf %15, %19 : vector<8x8xf32>
    %21 = math.exp %20 : vector<8x8xf32>
    %cst_14 = arith.constant dense<0.000000e+00> : vector<8xf32>
    %22 = vector.multi_reduction <add>, %21, %cst_14 [1] : vector<8x8xf32> to vector<8xf32>
    %23 = vector.shape_cast %22 : vector<8xf32> to vector<8x1xf32>
    %24 = arith.subf %20, %12 : vector<8x8xf32>
    %25 = arith.mulf %21, %24 : vector<8x8xf32>
    %cst_15 = arith.constant dense<0.000000e+00> : vector<8xf32>
    %26 = vector.multi_reduction <add>, %25, %cst_15 [1] : vector<8x8xf32> to vector<8xf32>
    %27 = vector.shape_cast %26 : vector<8xf32> to vector<8x1xf32>
    %28 = arith.divf %27, %23 : vector<8x1xf32>
    %29 = math.log %23 : vector<8x1xf32>
    %30 = arith.subf %28, %29 : vector<8x1xf32>
    %cst_16 = arith.constant dense<0.000000e+00> : vector<1xf32>
    %31 = vector.multi_reduction <add>, %30, %cst_16 [0] : vector<8x1xf32> to vector<1xf32>
    %32 = vector.shape_cast %31 : vector<1xf32> to vector<1x1xf32>
    %33 = arith.addf %16, %32 : vector<1x1xf32>
    %c0_17 = arith.constant 0 : index
    %c0_18 = arith.constant 0 : index
    %34 = vector.load %arg11[%c0_17, %c0_18] : memref<1x1xf32, #tpu.memory_space<vmem>>, vector<1x1xf32>
    tpu.vector_store %arg11[%c0_17, %c0_18], %33 {strides = array<i32>} : memref<1x1xf32, #tpu.memory_space<vmem>>, vector<1x1xf32>,
    %c0_19 = arith.constant 0 : index
    %c0_20 = arith.constant 0 : index
    %35 = vector.load %arg2[%c0_19, %c0_20] : memref<8x32xbf16, #tpu.memory_space<vmem>>, vector<8x32xbf16>
    %c0_21 = arith.constant 0 : index
    %c0_22 = arith.constant 0 : index
    %36 = vector.load %arg9[%c0_21, %c0_22] : memref<32x8xbf16, #tpu.memory_space<vmem>>, vector<32x8xbf16>
    %cst_23 = arith.constant dense<0.000000e+00> : vector<8x8xf32>
    %37 = tpu.matmul %35, %36, %cst_23 {dimension_numbers = #tpu.dot_dimension_numbers<[1], [0], [0], [1], [0, 0, 1, 1], [], []>} : vector<8x32xbf16>, vector<32x8xbf16>, vector<8x8xf32> -> vector<8x8xf32>
    %c0_24 = arith.constant 0 : index
    %c0_25 = arith.constant 0 : index
    %38 = vector.load %arg11[%c0_24, %c0_25] : memref<1x1xf32, #tpu.memory_space<vmem>>, vector<1x1xf32>
    %cst_26 = arith.constant dense<0xFF800000> : vector<8xf32>
    %39 = vector.multi_reduction <maximumf>, %37, %cst_26 [1] : vector<8x8xf32> to vector<8xf32>
    %40 = vector.shape_cast %39 : vector<8xf32> to vector<8x1xf32>
    %41 = vector.broadcast %40 : vector<8x1xf32> to vector<8x8xf32>
    %42 = arith.subf %37, %41 : vector<8x8xf32>
    %43 = math.exp %42 : vector<8x8xf32>
    %cst_27 = arith.constant dense<0.000000e+00> : vector<8xf32>
    %44 = vector.multi_reduction <add>, %43, %cst_27 [1] : vector<8x8xf32> to vector<8xf32>
    %45 = vector.shape_cast %44 : vector<8xf32> to vector<8x1xf32>
    %46 = arith.subf %42, %12 : vector<8x8xf32>
    %47 = arith.mulf %43, %46 : vector<8x8xf32>
    %cst_28 = arith.constant dense<0.000000e+00> : vector<8xf32>
    %48 = vector.multi_reduction <add>, %47, %cst_28 [1] : vector<8x8xf32> to vector<8xf32>
    %49 = vector.shape_cast %48 : vector<8xf32> to vector<8x1xf32>
    %50 = arith.divf %49, %45 : vector<8x1xf32>
    %51 = math.log %45 : vector<8x1xf32>
    %52 = arith.subf %50, %51 : vector<8x1xf32>
    %cst_29 = arith.constant dense<0.000000e+00> : vector<1xf32>
    %53 = vector.multi_reduction <add>, %52, %cst_29 [0] : vector<8x1xf32> to vector<1xf32>
    %54 = vector.shape_cast %53 : vector<1xf32> to vector<1x1xf32>
    %55 = arith.addf %38, %54 : vector<1x1xf32>
    %c0_30 = arith.constant 0 : index
    %c0_31 = arith.constant 0 : index
    %56 = vector.load %arg11[%c0_30, %c0_31] : memref<1x1xf32, #tpu.memory_space<vmem>>, vector<1x1xf32>
    tpu.vector_store %arg11[%c0_30, %c0_31], %55 {strides = array<i32>} : memref<1x1xf32, #tpu.memory_space<vmem>>, vector<1x1xf32>,
    %c0_i32_32 = arith.constant 0 : i32
    %57 = arith.cmpi eq, %arg0, %c0_i32_32 : i32
    %58 = arith.extui %57 : i1 to i32
    %c0_i32_33 = arith.constant 0 : i32
    %59 = arith.cmpi ne, %58, %c0_i32_33 : i32
    scf.if %59 {
      %c0_34 = arith.constant 0 : index
      %c0_35 = arith.constant 0 : index
      %60 = vector.load %arg11[%c0_34, %c0_35] : memref<1x1xf32, #tpu.memory_space<vmem>>, vector<1x1xf32>
      %cst_36 = arith.constant 1.250000e-01 : f32
      %61 = vector.broadcast %cst_36 : f32 to vector<1x1xf32>
      %62 = arith.mulf %60, %61 : vector<1x1xf32>
      %c0_37 = arith.constant 0 : index
      %c0_38 = arith.constant 0 : index
      %63 = vector.load %arg8[%c0_37, %c0_38] : memref<1x1xf32, #tpu.memory_space<vmem>>, vector<1x1xf32>
      tpu.vector_store %arg8[%c0_37, %c0_38], %62 {strides = array<i32>} : memref<1x1xf32, #tpu.memory_space<vmem>>, vector<1x1xf32>,
    } else {
    }
    return
  }
  func.func @transform_0(%arg0: i32) -> (i32, i32) {
    %c0_i32 = arith.constant 0 : i32
    %c0_i32_0 = arith.constant 0 : i32
    return %arg0, %c0_i32 : i32, i32
  }
  func.func @transform_1(%arg0: i32) -> (i32, i32) {
    %c0_i32 = arith.constant 0 : i32
    %c0_i32_0 = arith.constant 0 : i32
    return %arg0, %c0_i32 : i32, i32
  }
  func.func @transform_4(%arg0: i32) -> (i32, i32) {
    %c0_i32 = arith.constant 0 : i32
    %c0_i32_0 = arith.constant 0 : i32
    return %arg0, %c0_i32 : i32, i32
  }
  func.func @transform_5(%arg0: i32) -> (i32, i32) {
    %c0_i32 = arith.constant 0 : i32
    %c0_i32_0 = arith.constant 0 : i32
    %c0_i32_1 = arith.constant 0 : i32
    return %c0_i32, %c0_i32_0 : i32, i32
  }
  func.func @transform_6(%arg0: i32) -> (i32, i32) {
    %c0_i32 = arith.constant 0 : i32
    %c0_i32_0 = arith.constant 0 : i32
    %c0_i32_1 = arith.constant 0 : i32
    return %c0_i32, %c0_i32_0 : i32, i32
  }
  func.func @transform_7(%arg0: i32) -> (i32, i32) {
    %c0_i32 = arith.constant 0 : i32
    %c0_i32_0 = arith.constant 0 : i32
    %c0_i32_1 = arith.constant 0 : i32
    return %c0_i32, %c0_i32_0 : i32, i32
  }
}

</mosaic_0001>

<llo_original>
// kernel: tpu_custom_call.1
$region0: #{tpu_custom_call.1}
  #allocation0 [shape = 'u32[]', space=smem, size = 0x4, offset = 0x4, fixed_abs, tag = 'smem constant byte address 0x4 - core index']
  #allocation1 [shape = 'u32[144,128]{1,0:T(1,128)}', space=vmem, size = 0x12000, scoped, tag = 'internal scratch']
  #allocation2 [shape = 'bf16[32,8]{1,0:T(16,128)(2,1)}', space=vmem, size = 0x2000, scoped, tag = 'scratch operand']
  #allocation3 [shape = 'bf16[32,8]{1,0:T(16,128)(2,1)}', space=vmem, size = 0x2000, scoped, tag = 'scratch operand']
  #allocation4 [shape = 'f32[1,1]{1,0:T(1,128)}', space=vmem, size = 0x200, scoped, tag = 'scratch operand']
  #allocation5 [shape = 's32[2]{0}', space=sflag, size = 0x8, scoped, tag = 'scratch operand']
  #allocation8 [shape = 's32[]', space=sflag, size = 0x4, offset = 0, fixed_abs, tag = 'sflag constant byte address 0x0 - dummy sync flag']
  #allocation9 [shape = 's32[]', space=sflag, size = 0x4, offset = 0, fixed_abs, tag = 'sflag constant byte address 0x0 - dummy sync flag']
  %s0 = inlined_call_operand.vmem [shape: bf16[8,32], index: 0, kind: input, shape index: {}]
  %s1 = inlined_call_operand.vmem [shape: bf16[8,32], index: 1, kind: input, shape index: {}]
  %s2 = inlined_call_operand.vmem [shape: bf16[32,8], index: 2, kind: input, shape index: {}]
  %s3 = inlined_call_operand.vmem [shape: bf16[32,8], index: 3, kind: input, shape index: {}]
  %s4 = inlined_call_operand.vmem [shape: f32[8,1], index: 4, kind: input, shape index: {}]
  %s5 = inlined_call_operand.vmem [shape: f32[1,8], index: 5, kind: input, shape index: {}]
  %s6 = inlined_call_operand.vmem [shape: f32[1,8], index: 6, kind: input, shape index: {}]
  %s7 = inlined_call_operand.hbm [shape: f32[1,1], index: 7, kind: output, shape index: {}]
  %s8 = sld [smem:[#allocation0]]
  $region106: #{tpu_custom_call.1} parent=0
    _
  %s10 = ssub.s32 1, %s8
  %s11 = scalar_select 0, %s10, %s8
  $region1: #{tpu_custom_call.1} parent=0
    #allocation6 [shape = 'u8[512]{0}', space=vmem, size = 0x400, scoped, tag = 'output window, operand 0, single buffered']
    #allocation7 [shape = 's32[1]{0}', space=sflag, size = 0x4, scoped, tag = 'scoped memory for tpu_custom_call.1']
    %12 = vsyncpa [#allocation7], 0
    // Predicated region
    $region2: #{tpu_custom_call.1} parent=1 // pred_check
      _
    $region3: #{tpu_custom_call.1} parent=1 // pred_check_branch
      %14 = sbr.rel (0) target = $region5
    $region4: #{tpu_custom_call.1} parent=1 // pred_region
      _
    $region5: #{tpu_custom_call.1} parent=1 // pred_fallthru
      _
    // Predicated region
    $region6: #{tpu_custom_call.1} parent=1 // pred_check
      _
    $region7: #{tpu_custom_call.1} parent=1 // pred_check_branch
      %16 = sbr.rel (0) target = $region9
    $region8: #{tpu_custom_call.1} parent=1 // pred_region
      _
    $region9: #{tpu_custom_call.1} parent=1 // pred_fallthru
      _
    // Predicated region
    $region10: #{tpu_custom_call.1} parent=1 // pred_check
      _
    $region11: #{tpu_custom_call.1} parent=1 // pred_check_branch
      %18 = sbr.rel (0) target = $region13
    $region12: #{tpu_custom_call.1} parent=1 // pred_region
      _
    $region13: #{tpu_custom_call.1} parent=1 // pred_fallthru
      _
    // Predicated region
    $region14: #{tpu_custom_call.1} parent=1 // pred_check
      _
    $region15: #{tpu_custom_call.1} parent=1 // pred_check_branch
      %20 = sbr.rel (0) target = $region17
    $region16: #{tpu_custom_call.1} parent=1 // pred_region
      _
    $region17: #{tpu_custom_call.1} parent=1 // pred_fallthru
      _
    // Predicated region
    $region18: #{tpu_custom_call.1} parent=1 // pred_check
      _
    $region19: #{tpu_custom_call.1} parent=1 // pred_check_branch
      %22 = sbr.rel (0) target = $region21
    $region20: #{tpu_custom_call.1} parent=1 // pred_region
      _
    $region21: #{tpu_custom_call.1} parent=1 // pred_fallthru
      _
    %p24 = scmp.eq.s32.totalorder 0, 0
    // Predicated region
    $region22: #{tpu_custom_call.1} parent=1 // pred_check
      %p25 = pneg %p24
    $region23: #{tpu_custom_call.1} parent=1 // pred_check_branch
      %27 = sbr.rel (%p25) target = $region25
    $region24: #{tpu_custom_call.1} parent=1 // pred_region
      %p29 = scmp.lt.u32.totalorder 16, 8
      %p30 = pneg %p29
      // Predicated region
      $region26: #{tpu_custom_call.1} parent=24 // pred_check
        _
      $region27: #{tpu_custom_call.1} parent=24 // pred_check_branch
        %32 = sbr.rel (%p29) target = $region29
      $region28: #{tpu_custom_call.1} parent=24 // pred_region
        %s47 = sand.u32 16, 7
        %p48 = scmp.eq.s32.totalorder %s47, 0
        // Predicated region
        $region41: #{tpu_custom_call.1} parent=28 // pred_check
          %p49 = pneg %p48
        $region42: #{tpu_custom_call.1} parent=28 // pred_check_branch
          %51 = sbr.rel (%p49) target = $region44
        $region43: #{tpu_custom_call.1} parent=28 // pred_region
          loop: start=0, step=1, limit=1
          $region45: #{tpu_custom_call.1} parent=43 // loop_pre_header
            _
          $region46: #{tpu_custom_call.1} parent=43 // loop_header
            %s53 = sphi 0, %s57
            %p54 = scmp.ge.s32.totalorder %s53, 1
            %s58 = sphi %s2, %s2
            %s59 = sphi [#allocation2], [#allocation2]
          $region47: #{tpu_custom_call.1} parent=43 // loop_header_branch
            %56 = sbr.rel (%p54) target = $region51
          $region48: #{tpu_custom_call.1} parent=43 // loop_body
            %v60 = vld [vmem:[%s58] sm:$0xff]
            %61 = vst [vmem:[%s59] sm:$0xff] %v60
            %v62 = vld [vmem:[%s58 + $0x8] sm:$0xff]
            %63 = vst [vmem:[%s59 + $0x8] sm:$0xff] %v62
          $region49: #{tpu_custom_call.1} parent=43 // loop_footer
            %s57 = sadd.s32 1, %s53
          $region50: #{tpu_custom_call.1} parent=43 // loop_footer_branch
            %52 = sbr.rel target = $region46
          $region51: #{tpu_custom_call.1} parent=43 // loop_exit
            _
        $region44: #{tpu_custom_call.1} parent=28 // pred_fallthru
          _
        %p64 = pneg %p48
        // Predicated region
        $region52: #{tpu_custom_call.1} parent=28 // pred_check
          _
        $region53: #{tpu_custom_call.1} parent=28 // pred_check_branch
          %66 = sbr.rel (%p48) target = $region55
        $region54: #{tpu_custom_call.1} parent=28 // pred_region
          %s67 = sand.u32 16, 7
        $region55: #{tpu_custom_call.1} parent=28 // pred_fallthru
          _
      $region29: #{tpu_custom_call.1} parent=24 // pred_fallthru
        _
      // Predicated region
      $region30: #{tpu_custom_call.1} parent=24 // pred_check
        %p33 = pneg %p29
      $region31: #{tpu_custom_call.1} parent=24 // pred_check_branch
        %35 = sbr.rel (%p33) target = $region33
      $region32: #{tpu_custom_call.1} parent=24 // pred_region
        %s36 = sshllo.u32 0, 16
        loop: start=0, step=1, limit=1
        $region34: #{tpu_custom_call.1} parent=32 // loop_pre_header
          _
        $region35: #{tpu_custom_call.1} parent=32 // loop_header
          %s38 = sphi 0, %s42
          %p39 = scmp.ge.s32.totalorder %s38, 1
          %s43 = sphi %s2, %s2
          %s44 = sphi [#allocation2], [#allocation2]
        $region36: #{tpu_custom_call.1} parent=32 // loop_header_branch
          %41 = sbr.rel (%p39) target = $region40
        $region37: #{tpu_custom_call.1} parent=32 // loop_body
          %v45 = vld [vmem:[%s43] sm:%s36]
          %46 = vst [vmem:[%s44] sm:%s36] %v45
        $region38: #{tpu_custom_call.1} parent=32 // loop_footer
          %s42 = sadd.s32 1, %s38
        $region39: #{tpu_custom_call.1} parent=32 // loop_footer_branch
          %37 = sbr.rel target = $region35
        $region40: #{tpu_custom_call.1} parent=32 // loop_exit
          _
      $region33: #{tpu_custom_call.1} parent=24 // pred_fallthru
        _
      // Predicated region
      $region56: #{tpu_custom_call.1} parent=24 // pred_check
        _
      $region57: #{tpu_custom_call.1} parent=24 // pred_check_branch
        %70 = sbr.rel (0) target = $region59
      $region58: #{tpu_custom_call.1} parent=24 // pred_region
        %71 = vsyncadd [#allocation5], 256
      $region59: #{tpu_custom_call.1} parent=24 // pred_fallthru
        _
      %s72 = scalar_lea.sflag [#allocation5], 1
      %p74 = scmp.lt.u32.totalorder 16, 8
      %p75 = pneg %p74
      // Predicated region
      $region60: #{tpu_custom_call.1} parent=24 // pred_check
        _
      $region61: #{tpu_custom_call.1} parent=24 // pred_check_branch
        %77 = sbr.rel (%p74) target = $region63
      $region62: #{tpu_custom_call.1} parent=24 // pred_region
        %s92 = sand.u32 16, 7
        %p93 = scmp.eq.s32.totalorder %s92, 0
        // Predicated region
        $region75: #{tpu_custom_call.1} parent=62 // pred_check
          %p94 = pneg %p93
        $region76: #{tpu_custom_call.1} parent=62 // pred_check_branch
          %96 = sbr.rel (%p94) target = $region78
        $region77: #{tpu_custom_call.1} parent=62 // pred_region
          loop: start=0, step=1, limit=1
          $region79: #{tpu_custom_call.1} parent=77 // loop_pre_header
            _
          $region80: #{tpu_custom_call.1} parent=77 // loop_header
            %s98 = sphi 0, %s102
            %p99 = scmp.ge.s32.totalorder %s98, 1
            %s103 = sphi %s3, %s3
            %s104 = sphi [#allocation3], [#allocation3]
          $region81: #{tpu_custom_call.1} parent=77 // loop_header_branch
            %101 = sbr.rel (%p99) target = $region85
          $region82: #{tpu_custom_call.1} parent=77 // loop_body
            %v105 = vld [vmem:[%s103] sm:$0xff]
            %106 = vst [vmem:[%s104] sm:$0xff] %v105
            %v107 = vld [vmem:[%s103 + $0x8] sm:$0xff]
            %108 = vst [vmem:[%s104 + $0x8] sm:$0xff] %v107
          $region83: #{tpu_custom_call.1} parent=77 // loop_footer
            %s102 = sadd.s32 1, %s98
          $region84: #{tpu_custom_call.1} parent=77 // loop_footer_branch
            %97 = sbr.rel target = $region80
          $region85: #{tpu_custom_call.1} parent=77 // loop_exit
            _
        $region78: #{tpu_custom_call.1} parent=62 // pred_fallthru
          _
        %p109 = pneg %p93
        // Predicated region
        $region86: #{tpu_custom_call.1} parent=62 // pred_check
          _
        $region87: #{tpu_custom_call.1} parent=62 // pred_check_branch
          %111 = sbr.rel (%p93) target = $region89
        $region88: #{tpu_custom_call.1} parent=62 // pred_region
          %s112 = sand.u32 16, 7
        $region89: #{tpu_custom_call.1} parent=62 // pred_fallthru
          _
      $region63: #{tpu_custom_call.1} parent=24 // pred_fallthru
        _
      // Predicated region
      $region64: #{tpu_custom_call.1} parent=24 // pred_check
        %p78 = pneg %p74
      $region65: #{tpu_custom_call.1} parent=24 // pred_check_branch
        %80 = sbr.rel (%p78) target = $region67
      $region66: #{tpu_custom_call.1} parent=24 // pred_region
        %s81 = sshllo.u32 0, 16
        loop: start=0, step=1, limit=1
        $region68: #{tpu_custom_call.1} parent=66 // loop_pre_header
          _
        $region69: #{tpu_custom_call.1} parent=66 // loop_header
          %s83 = sphi 0, %s87
          %p84 = scmp.ge.s32.totalorder %s83, 1
          %s88 = sphi %s3, %s3
          %s89 = sphi [#allocation3], [#allocation3]
        $region70: #{tpu_custom_call.1} parent=66 // loop_header_branch
          %86 = sbr.rel (%p84) target = $region74
        $region71: #{tpu_custom_call.1} parent=66 // loop_body
          %v90 = vld [vmem:[%s88] sm:%s81]
          %91 = vst [vmem:[%s89] sm:%s81] %v90
        $region72: #{tpu_custom_call.1} parent=66 // loop_footer
          %s87 = sadd.s32 1, %s83
        $region73: #{tpu_custom_call.1} parent=66 // loop_footer_branch
          %82 = sbr.rel target = $region69
        $region74: #{tpu_custom_call.1} parent=66 // loop_exit
          _
      $region67: #{tpu_custom_call.1} parent=24 // pred_fallthru
        _
      // Predicated region
      $region90: #{tpu_custom_call.1} parent=24 // pred_check
        _
      $region91: #{tpu_custom_call.1} parent=24 // pred_check_branch
        %115 = sbr.rel (0) target = $region93
      $region92: #{tpu_custom_call.1} parent=24 // pred_region
        %116 = vsyncadd %s72, 256
      $region93: #{tpu_custom_call.1} parent=24 // pred_fallthru
        _
      %s117 = smul.u32 4, 4
      %s118 = smul.u32 %s117, 1
      %s119 = sshll.u32 %s118, 4
      %120 = dma.done [#allocation5], %s119
      %s121 = sshll.u32 %s118, 4
      %122 = dma.done %s72, %s121
      %vm123 = vcmask 0
      %124 = vst.msk [vmem:[#allocation4] sm:$0x1] %vm123, 0.0
    $region25: #{tpu_custom_call.1} parent=1 // pred_fallthru
      _
    %v125 = vld [vmem:[%s4] sm:$0xff]
    %v126 = vld [vmem:[%s5] sm:$0x1]
    %128 = vset.pattern.permute.xlu0 0
    %129 = vperm.xlu0 %128, %v125
    %v130 = vpop.permute.xlu0 %129
    %v133 = vlaneseq
    %v134 = vshrl.u32 %v133, 7
    %v135 = vsub.s32 0, %v134
    %v136 = vrot.slane %v126, %v135
    %vm138 = vcmp.eq.f32.partialorder %v130, %v136
    %v139 = vld [vmem:[%s6] sm:$0x1]
    %v141 = vlaneseq
    %v142 = vshrl.u32 %v141, 7
    %v143 = vsub.s32 0, %v142
    %v144 = vrot.slane %v139, %v143
    %v146 = vsel %vm138, %v144, -18.420681
    %v147 = vld [vmem:[%s0] sm:$0xf]
    %v148 = vld [vmem:[#allocation3] sm:$0xff]
    %v149 = vld [vmem:[#allocation3 + $0x8] sm:$0xff]
    %vm150 = vcmask 261120
    %v152 = vsel %vm150, %v147, 0
    %154 = vmatprep.subr.bf16.mxu0 0
    %155 = vmatpush1.bf16.msra.mxu0 %v148
    %156 = vmatprep.subr.bf16.mxu0 0
    %157 = vmatpush1.bf16.msra.mxu0 %v149
    %158 = vmatprep.subr.bf16.mxu0 0
    %159 = vmatpush1.bf16.msra.mxu0 0
    %160 = vmatprep.subr.bf16.mxu0 0
    %161 = vmatpush1.bf16.msra.mxu0 0
    %162 = vmatprep.subr.bf16.mxu0 0
    %163 = vmatpush1.bf16.msra.mxu0 0
    %164 = vmatprep.subr.bf16.mxu0 0
    %165 = vmatpush1.bf16.msra.mxu0 0
    %166 = vmatprep.subr.bf16.mxu0 0
    %167 = vmatpush1.bf16.msra.mxu0 0
    %168 = vmatprep.subr.bf16.mxu0 0
    %169 = vmatpush1.bf16.msra.mxu0 0
    %170 = vmatprep.subr.bf16.mxu0 0
    %171 = vmatpush1.bf16.msra.mxu0 0
    %172 = vmatprep.subr.bf16.mxu0 0
    %173 = vmatpush1.bf16.msra.mxu0 0
    %174 = vmatprep.subr.bf16.mxu0 0
    %175 = vmatpush1.bf16.msra.mxu0 0
    %176 = vmatprep.subr.bf16.mxu0 0
    %177 = vmatpush1.bf16.msra.mxu0 0
    %178 = vmatprep.subr.bf16.mxu0 0
    %179 = vmatpush1.bf16.msra.mxu0 0
    %180 = vmatprep.subr.bf16.mxu0 0
    %181 = vmatpush1.bf16.msra.mxu0 0
    %182 = vmatprep.subr.bf16.mxu0 0
    %183 = vmatpush1.bf16.msra.mxu0 0
    %184 = vmatprep.subr.bf16.mxu0 0
    %185 = vmatpush1.bf16.msra.mxu0 0
    %186 = vmatprep.mubr.bf16.mxu0 0
    %187 = vmatmul.mubr.bf16.gmra.mrb[0].mxu0 %v152
    %v188 = vpop.f32.mrb[0].mxu0
    %v189 = vadd.f32 0.0, %v188
    %v190 = vpop.f32.mrb[0].mxu0
    %v191 = vpop.f32.mrb[0].mxu0
    %v192 = vpop.f32.mrb[0].mxu0
    %193 = vdwg.mxu0
    %v194 = vld [vmem:[#allocation4] sm:$0x1]
    %vm195 = vcmask 64512
    %v196 = vsel %vm195, %v189, -inf
    %197 = vmax.xlane.f32.xlu0 %v196
    %v198 = vpop.xlane.xlu0 %197
    %v199 = vsub.f32 %v189, %v198
    %v200 = vmul.f32 %v199, 1.442695
    %v201 = vpow.pop %v200
    %v202 = vsel %vm195, %v201, 0.0
    %203 = vadd.xlane.f32.xlu0 %v202
    %v204 = vpop.xlane.xlu0 %203
    %v205 = vsub.f32 %v199, %v146
    %v206 = vmul.f32 %v201, %v205
    %v207 = vsel %vm195, %v206, 0.0
    %208 = vadd.xlane.f32.xlu0 %v207
    %v209 = vpop.xlane.xlu0 %208
    %v210 = vrcp.pop %v204
    %v211 = vmul.f32 %v209, %v210
    %v212 = vlog2.pop %v204
    %v213 = vmul.f32 %v212, 0.6931472
    %v214 = vsub.f32 %v211, %v213
    %v215 = vrot.slane %v214, 4
    %v216 = vadd.f32 %v214, %v215
    %v217 = vrot.slane %v216, 2
    %v218 = vadd.f32 %v216, %v217
    %v219 = vrot.slane %v218, 1
    %v220 = vadd.f32 %v218, %v219
    %v221 = vadd.f32 %v194, %v220
    %vm222 = vcmask 0
    %223 = vst.msk [vmem:[#allocation4] sm:$0x1] %vm222, %v221
    %v224 = vld [vmem:[%s1] sm:$0xf]
    %v225 = vld [vmem:[#allocation2] sm:$0xff]
    %v226 = vld [vmem:[#allocation2 + $0x8] sm:$0xff]
    %v228 = vsel %vm150, %v224, 0
    %230 = vmatprep.subr.bf16.mxu0 0
    %231 = vmatpush1.bf16.msra.mxu0 %v225
    %232 = vmatprep.subr.bf16.mxu0 0
    %233 = vmatpush1.bf16.msra.mxu0 %v226
    %234 = vmatprep.subr.bf16.mxu0 0
    %235 = vmatpush1.bf16.msra.mxu0 0
    %236 = vmatprep.subr.bf16.mxu0 0
    %237 = vmatpush1.bf16.msra.mxu0 0
    %238 = vmatprep.subr.bf16.mxu0 0
    %239 = vmatpush1.bf16.msra.mxu0 0
    %240 = vmatprep.subr.bf16.mxu0 0
    %241 = vmatpush1.bf16.msra.mxu0 0
    %242 = vmatprep.subr.bf16.mxu0 0
    %243 = vmatpush1.bf16.msra.mxu0 0
    %244 = vmatprep.subr.bf16.mxu0 0
    %245 = vmatpush1.bf16.msra.mxu0 0
    %246 = vmatprep.subr.bf16.mxu0 0
    %247 = vmatpush1.bf16.msra.mxu0 0
    %248 = vmatprep.subr.bf16.mxu0 0
    %249 = vmatpush1.bf16.msra.mxu0 0
    %250 = vmatprep.subr.bf16.mxu0 0
    %251 = vmatpush1.bf16.msra.mxu0 0
    %252 = vmatprep.subr.bf16.mxu0 0
    %253 = vmatpush1.bf16.msra.mxu0 0
    %254 = vmatprep.subr.bf16.mxu0 0
    %255 = vmatpush1.bf16.msra.mxu0 0
    %256 = vmatprep.subr.bf16.mxu0 0
    %257 = vmatpush1.bf16.msra.mxu0 0
    %258 = vmatprep.subr.bf16.mxu0 0
    %259 = vmatpush1.bf16.msra.mxu0 0
    %260 = vmatprep.subr.bf16.mxu0 0
    %261 = vmatpush1.bf16.msra.mxu0 0
    %262 = vmatprep.mubr.bf16.mxu0 0
    %263 = vmatmul.mubr.bf16.gmra.mrb[0].mxu0 %v228
    %v264 = vpop.f32.mrb[0].mxu0
    %v265 = vadd.f32 0.0, %v264
    %v266 = vpop.f32.mrb[0].mxu0
    %v267 = vpop.f32.mrb[0].mxu0
    %v268 = vpop.f32.mrb[0].mxu0
    %269 = vdwg.mxu0
    %v270 = vld [vmem:[#allocation4] sm:$0x1]
    %v271 = vsel %vm195, %v265, -inf
    %272 = vmax.xlane.f32.xlu0 %v271
    %v273 = vpop.xlane.xlu0 %272
    %v274 = vsub.f32 %v265, %v273
    %v275 = vmul.f32 %v274, 1.442695
    %v276 = vpow.pop %v275
    %v277 = vsel %vm195, %v276, 0.0
    %278 = vadd.xlane.f32.xlu0 %v277
    %v279 = vpop.xlane.xlu0 %278
    %v280 = vsub.f32 %v274, %v146
    %v281 = vmul.f32 %v276, %v280
    %v282 = vsel %vm195, %v281, 0.0
    %283 = vadd.xlane.f32.xlu0 %v282
    %v284 = vpop.xlane.xlu0 %283
    %v285 = vrcp.pop %v279
    %v286 = vmul.f32 %v284, %v285
    %v287 = vlog2.pop %v279
    %v288 = vmul.f32 %v287, 0.6931472
    %v289 = vsub.f32 %v286, %v288
    %v290 = vrot.slane %v289, 4
    %v291 = vadd.f32 %v289, %v290
    %v292 = vrot.slane %v291, 2
    %v293 = vadd.f32 %v291, %v292
    %v294 = vrot.slane %v293, 1
    %v295 = vadd.f32 %v293, %v294
    %v296 = vadd.f32 %v270, %v295
    %297 = vst.msk [vmem:[#allocation4] sm:$0x1] %vm222, %v296
    // Predicated region
    $region94: #{tpu_custom_call.1} parent=1 // pred_check
      %p298 = pneg %p24
    $region95: #{tpu_custom_call.1} parent=1 // pred_check_branch
      %300 = sbr.rel (%p298) target = $region97
    $region96: #{tpu_custom_call.1} parent=1 // pred_region
      %v301 = vld [vmem:[#allocation4] sm:$0x1]
      %v302 = vmul.f32 %v301, 0.125
      %303 = vst.msk [vmem:[#allocation6] sm:$0x1] %vm222, %v302
    $region97: #{tpu_custom_call.1} parent=1 // pred_fallthru
      _
    // Predicated region
    $region98: #{tpu_custom_call.1} parent=1 // pred_check
      _
    $region99: #{tpu_custom_call.1} parent=1 // pred_check_branch
      %305 = sbr.rel (0) target = $region101
    $region100: #{tpu_custom_call.1} parent=1 // pred_region
      %s307 = ssub.s32 16, 16
      %308 = vsyncadd [#allocation7], %s307
      %s310 = sshll.u32 [#allocation6], 4
      %s311 = int_to_ptr.vmem [resolvable:$true] %s310
      %313 = dma.vmem_to_hbm [thread:$0]  %s311, 16, %s7, [#allocation7]
    $region101: #{tpu_custom_call.1} parent=1 // pred_fallthru
      _
    // Predicated region
    $region102: #{tpu_custom_call.1} parent=1 // pred_check
      _
    $region103: #{tpu_custom_call.1} parent=1 // pred_check_branch
      %315 = sbr.rel (0) target = $region105
    $region104: #{tpu_custom_call.1} parent=1 // pred_region
      %316 = dma.done [#allocation7], 16
    $region105: #{tpu_custom_call.1} parent=1 // pred_fallthru
      _
    %317 = vsyncpa [#allocation7], 1
  %318 = vsyncmov [#allocation5]
  %s319 = vpop.sfrf %318
  %p320 = scmp.eq.s32.totalorder %s319, 0
  %p321 = pneg %p320
  %323 = shalt.err (%p321)
  %s324 = scalar_lea.sflag [#allocation5], 1
  %325 = vsyncmov %s324
  %s326 = vpop.sfrf %325
  %p327 = scmp.eq.s32.totalorder %s326, 0
  %p328 = pneg %p327
  %330 = shalt.err (%p328)

</llo_original>
